<compile_context>
chip_gen: v7x
topology: tpu7x:2x2x1
jax: 0.10.0
libtpu: 0.0.40
codegen_flags: <defaults>
</compile_context>

<pallas_src>
import functools

import jax
import jax.numpy as jnp
import numpy as np
from jax import lax
from jax.experimental import pallas as pl
from jax.experimental.pallas import tpu as pltpu


# -----------------------------------------------------------------------------
# Kernel 1: fused motion/scene features + both-direction LSTM input projection
# -----------------------------------------------------------------------------
def _feat_proj_kernel(x_ref, wms_ref, bms_ref, wih_ref, bih_ref, o_ref):
    xb = x_ref[...]                                            # (R, Din) bf16
    # one matmul for BOTH motion and scene features
    ms = jnp.maximum(
        jnp.dot(xb, wms_ref[...], preferred_element_type=jnp.float32)
        + bms_ref[...], 0.0)                                   # (R, M+S) f32
    # VMEM concat -> one full-K projection matmul for BOTH directions (8H)
    combined = jnp.concatenate([xb, ms.astype(jnp.bfloat16)], axis=-1)
    proj = (jnp.dot(combined, wih_ref[...], preferred_element_type=jnp.float32)
            + bih_ref[...])
    o_ref[...] = proj.astype(o_ref.dtype)


def fused_feature_projection(x2d, pp, *, row_tile=512):
    """x2d: (M, in_dim) bf16 rows (time-major) -> (M, 8H) bf16 gate projections."""
    M, Din = x2d.shape
    H8 = pp["w_ih"].shape[1]
    if M <= row_tile:
        # >=2 grid steps when cheap so both v7x TCs get work
        R = (M // 2) if (M % 16 == 0 and M >= 16) else M
    else:
        R = row_tile                     # multiple of 8; ragged tail is masked
    grid = (pl.cdiv(M, R),)
    return pl.pallas_call(
        _feat_proj_kernel,
        out_shape=jax.ShapeDtypeStruct((M, H8), jnp.bfloat16),
        grid=grid,
        in_specs=[
            pl.BlockSpec((R, Din), lambda i: (i, 0)),
            pl.BlockSpec(pp["w_ms"].shape, lambda i: (0, 0)),
            pl.BlockSpec(pp["b_ms"].shape, lambda i: (0, 0)),
            pl.BlockSpec(pp["w_ih"].shape, lambda i: (0, 0)),
            pl.BlockSpec(pp["b_ih"].shape, lambda i: (0, 0)),
        ],
        out_specs=pl.BlockSpec((R, H8), lambda i: (i, 0)),
        compiler_params=pltpu.CompilerParams(
            dimension_semantics=("parallel",),
            vmem_limit_bytes=32 * 1024 * 1024),
    )(x2d, pp["w_ms"], pp["b_ms"], pp["w_ih"], pp["b_ih"])


# -----------------------------------------------------------------------------
# Kernel 2: fused bidirectional LSTM recurrence + final fc + sigmoid
# -----------------------------------------------------------------------------
def _bilstm_fc_kernel(xf_ref, xb_ref, whh_ref, wfc_ref, bfc_ref, o_ref,
                      h_scr, c_scr, hbuf_f, hbuf_b, *, t_chunk, unroll):
    c = pl.program_id(0)
    n_chunks = pl.num_programs(0)
    T = o_ref.shape[0]
    H = hbuf_f.shape[-1]
    H4 = 4 * H

    @pl.when(c == 0)
    def _():
        h_scr[...] = jnp.zeros_like(h_scr)
        c_scr[...] = jnp.zeros_like(c_scr)
        o_ref[...] = jnp.zeros_like(o_ref)

    def act(gates, c_prev):
        # gate columns pre-ordered (i, f, o, g): one sigmoid + one tanh
        s = jax.nn.sigmoid(gates[:, :3 * H])
        g = jnp.tanh(gates[:, 3 * H:])
        i_g = s[:, :H]
        f_g = s[:, H:2 * H]
        o_g = s[:, 2 * H:3 * H]
        c_new = f_g * c_prev + i_g * g
        h_new = o_g * jnp.tanh(c_new)
        return h_new, c_new

    def body(j, carry):
        # single fused MXU push per timestep: block-diagonal whh, both dirs
        g_pre = jnp.dot(h_scr[...].astype(jnp.bfloat16), whh_ref[...],
                        preferred_element_type=jnp.float32)     # (B, 8H)
        gates_f = xf_ref[j].astype(jnp.float32) + g_pre[:, :H4]
        gates_b = xb_ref[t_chunk - 1 - j].astype(jnp.float32) + g_pre[:, H4:]

        h_f, c_f = act(gates_f, c_scr[:, :H])
        h_b, c_b = act(gates_b, c_scr[:, H:])
        c_scr[:, :H] = c_f
        c_scr[:, H:] = c_b
        h_scr[:, :H] = h_f
        h_scr[:, H:] = h_b
        # stash hidden rows; fc reduction + output RMW happen per-chunk
        hbuf_f[pl.ds(j, 1)] = h_f[None]
        hbuf_b[pl.ds(t_chunk - 1 - j, 1)] = h_b[None]
        return carry

    lax.fori_loop(0, t_chunk, body, 0, unroll=unroll)

    # ---- chunk epilogue: fc over the whole chunk + two slab read-add-writes
    wfc = wfc_ref[...]                                          # (1, 2H)
    logits_f = jnp.sum(hbuf_f[...] * wfc[:, :H], axis=-1)       # (t_chunk, B)
    logits_b = jnp.sum(hbuf_b[...] * wfc[:, H:], axis=-1)       # (t_chunk, B)

    base = c * t_chunk
    rb = T - base - t_chunk
    if t_chunk % 8 == 0:
        base = pl.multiple_of(base, 8)
        rb = pl.multiple_of(rb, 8)
    # forward slab: global rows [base, base+t_chunk)
    o_ref[pl.ds(base, t_chunk), :] = o_ref[pl.ds(base, t_chunk), :] + logits_f
    # backward slab: global rows [T-base-t_chunk, T-base) (hbuf_b already
    # stored in ascending global-time order)
    o_ref[pl.ds(rb, t_chunk), :] = o_ref[pl.ds(rb, t_chunk), :] + logits_b

    @pl.when(c == n_chunks - 1)
    def _():
        o_ref[...] = jax.nn.sigmoid(o_ref[...] + bfc_ref[...])


def _pick_unroll(t_chunk):
    if t_chunk <= 16:
        return True
    for u in (8, 4, 2):
        if t_chunk % u == 0:
            return u
    return 1


def bidirectional_lstm_fc(xproj, whh_blk, wfc, bfc, *, t_chunk):
    """xproj: (T_pad, B, 8H) bf16 time-major gate inputs ([fwd 4H | bwd 4H]).

    Returns logits->probs of shape (T_pad, B) = sigmoid(fc([h_fwd, h_bwd])).
    """
    T, B, H8 = xproj.shape
    H4 = H8 // 2
    H = H4 // 4
    assert T % t_chunk == 0
    n_chunks = T // t_chunk
    unroll = _pick_unroll(t_chunk)
    kernel = functools.partial(_bilstm_fc_kernel, t_chunk=t_chunk, unroll=unroll)
    return pl.pallas_call(
        kernel,
        out_shape=jax.ShapeDtypeStruct((T, B), jnp.float32),
        grid=(n_chunks,),
        in_specs=[
            # forward gates: chunk c, first 4H of the last axis
            pl.BlockSpec((t_chunk, B, H4), lambda c: (c, 0, 0)),
            # backward gates: reversed chunk order, second 4H (no HBM reverse)
            pl.BlockSpec((t_chunk, B, H4),
                         lambda c, n=n_chunks: (n - 1 - c, 0, 1)),
            pl.BlockSpec((2 * H, H8), lambda c: (0, 0)),     # block-diag whh
            pl.BlockSpec((1, 2 * H), lambda c: (0, 0)),      # fc weights
            pl.BlockSpec((1, 1), lambda c: (0, 0)),          # fc bias
        ],
        out_specs=pl.BlockSpec((T, B), lambda c: (0, 0)),    # VMEM-resident
        scratch_shapes=[
            pltpu.VMEM((B, 2 * H), jnp.float32),             # h_cat state
            pltpu.VMEM((B, 2 * H), jnp.float32),             # c_cat state
            pltpu.VMEM((t_chunk, B, H), jnp.float32),        # fwd chunk h's
            pltpu.VMEM((t_chunk, B, H), jnp.float32),        # bwd chunk h's
        ],
        compiler_params=pltpu.CompilerParams(
            dimension_semantics=("arbitrary",),              # true recurrence
            vmem_limit_bytes=32 * 1024 * 1024),
    )(xproj, xproj, whh_blk, wfc, bfc)


# -----------------------------------------------------------------------------
# Parameter construction (PyTorch-style uniform init) and kernel-layout prep
# -----------------------------------------------------------------------------
def init_params(key, in_dim, motion_dim, scene_dim, hid_dim):
    def uniform(k, shape, fan_in):
        bound = 1.0 / np.sqrt(fan_in)
        return jax.random.uniform(k, shape, jnp.float32, -bound, bound)

    ks = jax.random.split(key, 16)
    comb_dim = in_dim + motion_dim + scene_dim
    return {
        "wm": uniform(ks[0], (in_dim, motion_dim), in_dim),
        "bm": uniform(ks[1], (motion_dim,), in_dim),
        "ws": uniform(ks[2], (in_dim, scene_dim), in_dim),
        "bs": uniform(ks[3], (scene_dim,), in_dim),
        "wih_f": uniform(ks[4], (comb_dim, 4 * hid_dim), hid_dim),
        "whh_f": uniform(ks[5], (hid_dim, 4 * hid_dim), hid_dim),
        "bih_f": uniform(ks[6], (4 * hid_dim,), hid_dim),
        "bhh_f": uniform(ks[7], (4 * hid_dim,), hid_dim),
        "wih_b": uniform(ks[8], (comb_dim, 4 * hid_dim), hid_dim),
        "whh_b": uniform(ks[9], (hid_dim, 4 * hid_dim), hid_dim),
        "bih_b": uniform(ks[10], (4 * hid_dim,), hid_dim),
        "bhh_b": uniform(ks[11], (4 * hid_dim,), hid_dim),
        "wfc": uniform(ks[12], (2 * hid_dim, 1), 2 * hid_dim),
        "bfc": uniform(ks[13], (1,), 2 * hid_dim),
    }


def prepare_params(p):
    """Fold/reorder PyTorch-layout params into the fused-kernel layout."""
    H = p["whh_f"].shape[0]

    def reorder_gates(w):
        # PyTorch LSTM gate order (i, f, g, o) -> kernel order (i, f, o, g)
        return jnp.concatenate(
            [w[..., :2 * H], w[..., 3 * H:4 * H], w[..., 2 * H:3 * H]],
            axis=-1)

    # fused motion+scene feature weight: one (Din, M+S) matmul
    w_ms = jnp.concatenate([p["wm"], p["ws"]], axis=1).astype(jnp.bfloat16)
    b_ms = jnp.concatenate([p["bm"], p["bs"]], axis=0)[None, :]

    # fused projection weight for both directions: rows ordered [x|motion|scene]
    w_ih = jnp.concatenate(
        [reorder_gates(p["wih_f"]), reorder_gates(p["wih_b"])],
        axis=1).astype(jnp.bfloat16)
    b_ih = jnp.concatenate(
        [reorder_gates(p["bih_f"] + p["bhh_f"]),
         reorder_gates(p["bih_b"] + p["bhh_b"])], axis=0)[None, :]

    # block-diagonal recurrent weight: ONE matmul per step for both directions
    whh_f = reorder_gates(p["whh_f"])
    whh_b = reorder_gates(p["whh_b"])
    z = jnp.zeros((H, 4 * H), jnp.float32)
    whh_blk = jnp.concatenate(
        [jnp.concatenate([whh_f, z], axis=1),
         jnp.concatenate([z, whh_b], axis=1)], axis=0).astype(jnp.bfloat16)

    return {
        "w_ms": w_ms, "b_ms": b_ms,
        "w_ih": w_ih, "b_ih": b_ih,
        "whh_blk": whh_blk,
        "wfc": p["wfc"].reshape(1, 2 * H),   # cols [:H] fwd half, [H:] bwd half
        "bfc": p["bfc"].reshape(1, 1),
    }


# -----------------------------------------------------------------------------
# Forward pass (Pallas hot path + minimal glue)
# -----------------------------------------------------------------------------
def dsn_forward(x, p):
    """x: (B, T, in_dim) f32 -> (B, T, 1) f32 (matches the PyTorch module)."""
    B, T, in_dim = x.shape
    pp = prepare_params(p)

    # small layout change of the cheapest tensor only; cast to bf16 here so
    # kernel 1's input DMA is halved.
    x_tm = jnp.transpose(x, (1, 0, 2)).reshape(T * B, in_dim).astype(jnp.bfloat16)

    xproj2d = fused_feature_projection(x_tm, pp)          # (T*B, 8H) bf16
    xproj = xproj2d.reshape(T, B, xproj2d.shape[1])       # free reshape

    # pick a time-chunk; zero-pad T up to a multiple of it (exact for an LSTM
    # with zero init state: zero gates keep h=c=0 through padded steps).
    t_chunk = T if T <= 32 else 32
    n_chunks = -(-T // t_chunk)
    T_pad = n_chunks * t_chunk
    if T_pad != T:
        xproj = jnp.pad(xproj, ((0, T_pad - T), (0, 0), (0, 0)))

    probs_tb = bidirectional_lstm_fc(
        xproj, pp["whh_blk"], pp["wfc"], pp["bfc"], t_chunk=t_chunk)  # (T_pad,B)
    return jnp.transpose(probs_tb[:T], (1, 0))[:, :, None]           # (B,T,1)


# -----------------------------------------------------------------------------
# Pure-JAX f32 reference (PyTorch semantics) for a sanity check
# -----------------------------------------------------------------------------
def dsn_forward_ref(x, p):
    B, T, in_dim = x.shape
    hid_dim = p["whh_f"].shape[0]
    motion = jax.nn.relu(x @ p["wm"] + p["bm"])
    scene = jax.nn.relu(x @ p["ws"] + p["bs"])
    combined = jnp.concatenate([x, motion, scene], axis=-1)

    def run_dir(seq, wih, whh, bih, bhh):
        xproj = seq @ wih + (bih + bhh)

        def step(carry, g_x):
            h, c = carry
            gates = g_x + h @ whh
            i = jax.nn.sigmoid(gates[:, 0 * hid_dim:1 * hid_dim])
            f = jax.nn.sigmoid(gates[:, 1 * hid_dim:2 * hid_dim])
            g = jnp.tanh(gates[:, 2 * hid_dim:3 * hid_dim])
            o = jax.nn.sigmoid(gates[:, 3 * hid_dim:4 * hid_dim])
            c = f * c + i * g
            h = o * jnp.tanh(c)
            return (h, c), h

        h0 = jnp.zeros((B, hid_dim), jnp.float32)
        _, hs = lax.scan(step, (h0, h0), xproj)
        return hs

    seq = combined.transpose(1, 0, 2)
    h_f = run_dir(seq, p["wih_f"], p["whh_f"], p["bih_f"], p["bhh_f"])
    h_b = run_dir(seq[::-1], p["wih_b"], p["whh_b"], p["bih_b"], p["bhh_b"])[::-1]
    h = jnp.concatenate([h_f.transpose(1, 0, 2), h_b.transpose(1, 0, 2)], -1)
    return jax.nn.sigmoid(h @ p["wfc"] + p["bfc"])


# -----------------------------------------------------------------------------
if __name__ == "__main__":
    B, T = 2, 8
    in_dim, motion_dim, scene_dim, hid_dim = 128, 32, 64, 64

    key = jax.random.PRNGKey(0)
    kx, kp = jax.random.split(key)
    x = jax.random.normal(kx, (B, T, in_dim), dtype=jnp.float32)
    params = init_params(kp, in_dim, motion_dim, scene_dim, hid_dim)

    out = jax.block_until_ready(dsn_forward(x, params))
    assert out.shape == (B, T, 1)

    ref = jax.block_until_ready(dsn_forward_ref(x, params))
    np.testing.assert_allclose(np.asarray(out), np.asarray(ref),
                               atol=2e-2, rtol=2e-2)

    print("KERNEL_OK")
</pallas_src>

<mosaic_0001>
module attributes {stable_mosaic.version = 11 : i64} {
  func.func @_feat_proj_kernel(%arg0: i32, %arg1: memref<8x128xbf16, #tpu.memory_space<vmem>>, %arg2: memref<128x96xbf16, #tpu.memory_space<vmem>>, %arg3: memref<1x96xf32, #tpu.memory_space<vmem>>, %arg4: memref<224x512xbf16, #tpu.memory_space<vmem>>, %arg5: memref<1x512xf32, #tpu.memory_space<vmem>>, %arg6: memref<8x512xbf16, #tpu.memory_space<vmem>>) attributes {dimension_semantics = [#tpu.dimension_semantics<parallel>], iteration_bounds = array<i64: 2>, scalar_prefetch = 0 : i64, scratch_operands = 0 : i64, tpu.core_type = #tpu.core_type<tc>, window_params = [{transform_indices = @transform_0, window_bounds = array<i64: 8, 128>}, {pipeline_mode = #tpu.pipeline_mode<synchronous>, transform_indices = @transform_1, window_bounds = array<i64: 128, 96>}, {pipeline_mode = #tpu.pipeline_mode<synchronous>, transform_indices = @transform_2, window_bounds = array<i64: 1, 96>}, {pipeline_mode = #tpu.pipeline_mode<synchronous>, transform_indices = @transform_3, window_bounds = array<i64: 224, 512>}, {pipeline_mode = #tpu.pipeline_mode<synchronous>, transform_indices = @transform_4, window_bounds = array<i64: 1, 512>}, {transform_indices = @transform_5, window_bounds = array<i64: 8, 512>}]} {
    %c0 = arith.constant 0 : index
    %c0_0 = arith.constant 0 : index
    %0 = vector.load %arg1[%c0, %c0_0] : memref<8x128xbf16, #tpu.memory_space<vmem>>, vector<8x128xbf16>
    %c0_1 = arith.constant 0 : index
    %c0_2 = arith.constant 0 : index
    %1 = vector.load %arg2[%c0_1, %c0_2] : memref<128x96xbf16, #tpu.memory_space<vmem>>, vector<128x96xbf16>
    %cst = arith.constant dense<0.000000e+00> : vector<8x96xf32>
    %2 = tpu.matmul %0, %1, %cst {dimension_numbers = #tpu.dot_dimension_numbers<[1], [0], [0], [1], [0, 0, 1, 1], [], []>} : vector<8x128xbf16>, vector<128x96xbf16>, vector<8x96xf32> -> vector<8x96xf32>
    %c0_3 = arith.constant 0 : index
    %c0_4 = arith.constant 0 : index
    %3 = vector.load %arg3[%c0_3, %c0_4] : memref<1x96xf32, #tpu.memory_space<vmem>>, vector<1x96xf32>
    %4 = vector.broadcast %3 : vector<1x96xf32> to vector<8x96xf32>
    %5 = arith.addf %2, %4 : vector<8x96xf32>
    %cst_5 = arith.constant 0.000000e+00 : f32
    %6 = vector.broadcast %cst_5 : f32 to vector<8x96xf32>
    %7 = arith.maximumf %5, %6 : vector<8x96xf32>
    %8 = arith.truncf %7 : vector<8x96xf32> to vector<8x96xbf16>
    %9 = tpu.concatenate %0, %8 in 1 : vector<8x128xbf16>, vector<8x96xbf16> -> vector<8x224xbf16>
    %c0_6 = arith.constant 0 : index
    %c0_7 = arith.constant 0 : index
    %10 = vector.load %arg4[%c0_6, %c0_7] : memref<224x512xbf16, #tpu.memory_space<vmem>>, vector<224x512xbf16>
    %cst_8 = arith.constant dense<0.000000e+00> : vector<8x512xf32>
    %11 = tpu.matmul %9, %10, %cst_8 {dimension_numbers = #tpu.dot_dimension_numbers<[1], [0], [0], [1], [0, 0, 1, 1], [], []>} : vector<8x224xbf16>, vector<224x512xbf16>, vector<8x512xf32> -> vector<8x512xf32>
    %c0_9 = arith.constant 0 : index
    %c0_10 = arith.constant 0 : index
    %12 = vector.load %arg5[%c0_9, %c0_10] : memref<1x512xf32, #tpu.memory_space<vmem>>, vector<1x512xf32>
    %13 = vector.broadcast %12 : vector<1x512xf32> to vector<8x512xf32>
    %14 = arith.addf %11, %13 : vector<8x512xf32>
    %15 = arith.truncf %14 : vector<8x512xf32> to vector<8x512xbf16>
    %c0_11 = arith.constant 0 : index
    %c0_12 = arith.constant 0 : index
    %16 = vector.load %arg6[%c0_11, %c0_12] : memref<8x512xbf16, #tpu.memory_space<vmem>>, vector<8x512xbf16>
    tpu.vector_store %arg6[%c0_11, %c0_12], %15 {strides = array<i32>} : memref<8x512xbf16, #tpu.memory_space<vmem>>, vector<8x512xbf16>,
    return
  }
  func.func @transform_0(%arg0: i32) -> (i32, i32) {
    %c0_i32 = arith.constant 0 : i32
    %c0_i32_0 = arith.constant 0 : i32
    return %arg0, %c0_i32 : i32, i32
  }
  func.func @transform_1(%arg0: i32) -> (i32, i32) {
    %c0_i32 = arith.constant 0 : i32
    %c0_i32_0 = arith.constant 0 : i32
    %c0_i32_1 = arith.constant 0 : i32
    return %c0_i32, %c0_i32_0 : i32, i32
  }
  func.func @transform_2(%arg0: i32) -> (i32, i32) {
    %c0_i32 = arith.constant 0 : i32
    %c0_i32_0 = arith.constant 0 : i32
    %c0_i32_1 = arith.constant 0 : i32
    return %c0_i32, %c0_i32_0 : i32, i32
  }
  func.func @transform_3(%arg0: i32) -> (i32, i32) {
    %c0_i32 = arith.constant 0 : i32
    %c0_i32_0 = arith.constant 0 : i32
    %c0_i32_1 = arith.constant 0 : i32
    return %c0_i32, %c0_i32_0 : i32, i32
  }
  func.func @transform_4(%arg0: i32) -> (i32, i32) {
    %c0_i32 = arith.constant 0 : i32
    %c0_i32_0 = arith.constant 0 : i32
    %c0_i32_1 = arith.constant 0 : i32
    return %c0_i32, %c0_i32_0 : i32, i32
  }
  func.func @transform_5(%arg0: i32) -> (i32, i32) {
    %c0_i32 = arith.constant 0 : i32
    %c0_i32_0 = arith.constant 0 : i32
    return %arg0, %c0_i32 : i32, i32
  }
}

</mosaic_0001>

<llo_original>
// kernel: tpu_custom_call.1
$region0: #{tpu_custom_call.1}
  #allocation0 [shape = 'u32[]', space=smem, size = 0x4, offset = 0x4, fixed_abs, tag = 'smem constant byte address 0x4 - core index']
  #allocation1 [shape = 'u32[144,128]{1,0:T(1,128)}', space=vmem, size = 0x12000, scoped, tag = 'internal scratch']
  %s0 = inlined_call_operand.vmem [shape: bf16[16,128], index: 0, kind: input, shape index: {}]
  %s1 = inlined_call_operand.vmem [shape: bf16[128,96], index: 1, kind: input, shape index: {}]
  %s2 = inlined_call_operand.vmem [shape: f32[1,96], index: 2, kind: input, shape index: {}]
  %s3 = inlined_call_operand.hbm [shape: bf16[224,512], index: 3, kind: input, shape index: {}]
  %s4 = inlined_call_operand.vmem [shape: f32[1,512], index: 4, kind: input, shape index: {}]
  %s5 = inlined_call_operand.hbm [shape: bf16[16,512], index: 5, kind: output, shape index: {}]
  %s6 = sld [smem:[#allocation0]]
  $region57: #{tpu_custom_call.1} parent=0
    _
  %s8 = ssub.s32 1, %s6
  %s9 = scalar_select 0, %s8, %s6
  $region1: #{tpu_custom_call.1} parent=0
    #allocation2 [shape = 'u8[229376]{0}', space=vmem, size = 0x38000, scoped, tag = 'input window, operand 3, single buffered']
    #allocation3 [shape = 's32[2]{0}', space=sflag, size = 0x8, scoped, tag = 'scoped memory for tpu_custom_call.1']
    #allocation4 [shape = 's32[2]{0}', space=sflag, size = 0x8, scoped, tag = 'scoped memory for tpu_custom_call.1']
    #allocation5 [shape = 'u8[16384]{0}', space=vmem, size = 0x4000, scoped, tag = 'output window, operand 0']
    %10 = vsyncpa [#allocation3], 0
    %11 = vsyncpa [#allocation4], 0
    %s12 = scalar_lea.sflag [#allocation4], 1
    %13 = vsyncpa %s12, 0
    loop: start=0, step=1, limit=4
    $region2: #{tpu_custom_call.1} parent=1 // loop_pre_header
      _
    $region3: #{tpu_custom_call.1} parent=1 // loop_header
      %s15 = sphi 0, %s19
      %p16 = scmp.ge.s32.totalorder %s15, 4
      %s25 = sphi 0, %s27
      %s28 = sphi 0, %s25
      %s29 = sphi 0, %s28
      %s45 = sphi 0, %s29
      %s49 = sphi 0, %s49
      %s51 = sphi 0, %s49
      %s52 = sphi 0, %s51
      %s66 = sphi 0, %s52
      %s70 = sphi 0, %s70
      %s72 = sphi 0, %s70
      %s73 = sphi 0, %s72
      %s87 = sphi 0, %s73
      %s91 = sphi 0, %s91
      %s93 = sphi 0, %s91
      %s94 = sphi 0, %s93
      %s108 = sphi 0, %s94
      %s112 = sphi 0, %s112
      %s114 = sphi 0, %s112
      %s115 = sphi 0, %s114
      %s129 = sphi 0, %s115
      %s135 = sphi 0, %s137
      %s138 = sphi 0, %s135
      %s139 = sphi 0, %s138
      %s155 = sphi 0, %s139
    $region4: #{tpu_custom_call.1} parent=1 // loop_header_branch
      %18 = sbr.rel (%p16) target = $region8
    $region5: #{tpu_custom_call.1} parent=1 // loop_body
      %s20 = ssub.s32 %s15, 1
      %s21 = ssub.s32 %s15, 2
      %s22 = sadd.s32 %s15, 1
      %s23 = ssub.s32 %s15, %s22
      %p24 = scmp.eq.s32.totalorder %s23, 0
      %s26 = sadd.s32 %s25, 1
      %s27 = scalar_select %p24, %s25, %s26
      %p30 = pneg %p24
      %p31 = scmp.eq.s32.totalorder %s15, 1
      %p32 = por %p30, %p31
      %p33 = scmp.ne.s32.totalorder %s25, %s28
      %p34 = scmp.eq.s32.totalorder %s15, 0
      %p35 = por %p33, %p34
      %p36 = scmp.ne.s32.totalorder %s25, %s28
      %p37 = scmp.eq.s32.totalorder %s20, 1
      %p38 = por %p36, %p37
      %p39 = scmp.ne.s32.totalorder %s28, %s29
      %p40 = scmp.eq.s32.totalorder %s20, 0
      %p41 = por %p39, %p40
      %p42 = scmp.ne.s32.totalorder %s28, %s29
      %p43 = scmp.eq.s32.totalorder %s21, 1
      %p44 = por %p42, %p43
      %p46 = scmp.ne.s32.totalorder %s29, %s45
      %p47 = scmp.eq.s32.totalorder %s21, 0
      %p48 = por %p46, %p47
      %s50 = sadd.s32 %s49, 1
      %p53 = scmp.eq.s32.totalorder %s15, 1
      %p54 = scmp.ne.s32.totalorder %s49, %s51
      %p55 = scmp.eq.s32.totalorder %s15, 0
      %p56 = por %p54, %p55
      %p57 = scmp.ne.s32.totalorder %s49, %s51
      %p58 = scmp.eq.s32.totalorder %s20, 1
      %p59 = por %p57, %p58
      %p60 = scmp.ne.s32.totalorder %s51, %s52
      %p61 = scmp.eq.s32.totalorder %s20, 0
      %p62 = por %p60, %p61
      %p63 = scmp.ne.s32.totalorder %s51, %s52
      %p64 = scmp.eq.s32.totalorder %s21, 1
      %p65 = por %p63, %p64
      %p67 = scmp.ne.s32.totalorder %s52, %s66
      %p68 = scmp.eq.s32.totalorder %s21, 0
      %p69 = por %p67, %p68
      %s71 = sadd.s32 %s70, 1
      %p74 = scmp.eq.s32.totalorder %s15, 1
      %p75 = scmp.ne.s32.totalorder %s70, %s72
      %p76 = scmp.eq.s32.totalorder %s15, 0
      %p77 = por %p75, %p76
      %p78 = scmp.ne.s32.totalorder %s70, %s72
      %p79 = scmp.eq.s32.totalorder %s20, 1
      %p80 = por %p78, %p79
      %p81 = scmp.ne.s32.totalorder %s72, %s73
      %p82 = scmp.eq.s32.totalorder %s20, 0
      %p83 = por %p81, %p82
      %p84 = scmp.ne.s32.totalorder %s72, %s73
      %p85 = scmp.eq.s32.totalorder %s21, 1
      %p86 = por %p84, %p85
      %p88 = scmp.ne.s32.totalorder %s73, %s87
      %p89 = scmp.eq.s32.totalorder %s21, 0
      %p90 = por %p88, %p89
      %s92 = sadd.s32 %s91, 1
      %p95 = scmp.eq.s32.totalorder %s15, 1
      %p96 = scmp.ne.s32.totalorder %s91, %s93
      %p97 = scmp.eq.s32.totalorder %s15, 0
      %p98 = por %p96, %p97
      %p99 = scmp.ne.s32.totalorder %s91, %s93
      %p100 = scmp.eq.s32.totalorder %s20, 1
      %p101 = por %p99, %p100
      %p102 = scmp.ne.s32.totalorder %s93, %s94
      %p103 = scmp.eq.s32.totalorder %s20, 0
      %p104 = por %p102, %p103
      %p105 = scmp.ne.s32.totalorder %s93, %s94
      %p106 = scmp.eq.s32.totalorder %s21, 1
      %p107 = por %p105, %p106
      %p109 = scmp.ne.s32.totalorder %s94, %s108
      %p110 = scmp.eq.s32.totalorder %s21, 0
      %p111 = por %p109, %p110
      %s113 = sadd.s32 %s112, 1
      %p116 = scmp.eq.s32.totalorder %s15, 1
      %p117 = scmp.ne.s32.totalorder %s112, %s114
      %p118 = scmp.eq.s32.totalorder %s15, 0
      %p119 = por %p117, %p118
      %p120 = scmp.ne.s32.totalorder %s112, %s114
      %p121 = scmp.eq.s32.totalorder %s20, 1
      %p122 = por %p120, %p121
      %p123 = scmp.ne.s32.totalorder %s114, %s115
      %p124 = scmp.eq.s32.totalorder %s20, 0
      %p125 = por %p123, %p124
      %p126 = scmp.ne.s32.totalorder %s114, %s115
      %p127 = scmp.eq.s32.totalorder %s21, 1
      %p128 = por %p126, %p127
      %p130 = scmp.ne.s32.totalorder %s115, %s129
      %p131 = scmp.eq.s32.totalorder %s21, 0
      %p132 = por %p130, %p131
      %s133 = ssub.s32 %s15, %s22
      %p134 = scmp.eq.s32.totalorder %s133, 0
      %s136 = sadd.s32 %s135, 1
      %s137 = scalar_select %p134, %s135, %s136
      %p140 = pneg %p134
      %p141 = scmp.eq.s32.totalorder %s15, 1
      %p142 = por %p140, %p141
      %p143 = scmp.ne.s32.totalorder %s135, %s138
      %p144 = scmp.eq.s32.totalorder %s15, 0
      %p145 = por %p143, %p144
      %p146 = scmp.ne.s32.totalorder %s135, %s138
      %p147 = scmp.eq.s32.totalorder %s20, 1
      %p148 = por %p146, %p147
      %p149 = scmp.ne.s32.totalorder %s138, %s139
      %p150 = scmp.eq.s32.totalorder %s20, 0
      %p151 = por %p149, %p150
      %p152 = scmp.ne.s32.totalorder %s138, %s139
      %p153 = scmp.eq.s32.totalorder %s21, 1
      %p154 = por %p152, %p153
      %p156 = scmp.ne.s32.totalorder %s139, %s155
      %p157 = scmp.eq.s32.totalorder %s21, 0
      %p158 = por %p156, %p157
      %p159 = scmp.le.s32.totalorder 1, %s15
      %p160 = scmp.lt.s32.totalorder %s15, 3
      %p161 = pnand %p159, %p160
      %p162 = pneg %p161
      // Predicated region
      $region9: #{tpu_custom_call.1} parent=5 // pred_check
        _
      $region10: #{tpu_custom_call.1} parent=5 // pred_check_branch
        %164 = sbr.rel (%p161) target = $region12
      $region11: #{tpu_custom_call.1} parent=5 // pred_region
        %s165 = ssub.s32 %s15, 1
        // Predicated region
        $region13: #{tpu_custom_call.1} parent=11 // pred_check
          %p166 = pneg %p62
        $region14: #{tpu_custom_call.1} parent=11 // pred_check_branch
          %168 = sbr.rel (%p166) target = $region16
        $region15: #{tpu_custom_call.1} parent=11 // pred_region
          _
        $region16: #{tpu_custom_call.1} parent=11 // pred_fallthru
          _
        // Predicated region
        $region17: #{tpu_custom_call.1} parent=11 // pred_check
          %p169 = pneg %p83
        $region18: #{tpu_custom_call.1} parent=11 // pred_check_branch
          %171 = sbr.rel (%p169) target = $region20
        $region19: #{tpu_custom_call.1} parent=11 // pred_region
          _
        $region20: #{tpu_custom_call.1} parent=11 // pred_fallthru
          _
        // Predicated region
        $region21: #{tpu_custom_call.1} parent=11 // pred_check
          %p172 = pneg %p104
        $region22: #{tpu_custom_call.1} parent=11 // pred_check_branch
          %174 = sbr.rel (%p172) target = $region24
        $region23: #{tpu_custom_call.1} parent=11 // pred_region
          %s176 = ssub.s32 7168, 7168
          %177 = vsyncadd [#allocation3], %s176
          %s178 = sshll.u32 [#allocation2], 4
          %s179 = int_to_ptr.vmem [resolvable:$true] %s178
          %184 = dma.hbm_to_vmem [thread:$0]  %s3, 7168, %s179, [#allocation3], 256, 256, 16
        $region24: #{tpu_custom_call.1} parent=11 // pred_fallthru
          _
        // Predicated region
        $region25: #{tpu_custom_call.1} parent=11 // pred_check
          %p185 = pneg %p125
        $region26: #{tpu_custom_call.1} parent=11 // pred_check_branch
          %187 = sbr.rel (%p185) target = $region28
        $region27: #{tpu_custom_call.1} parent=11 // pred_region
          _
        $region28: #{tpu_custom_call.1} parent=11 // pred_fallthru
          _
      $region12: #{tpu_custom_call.1} parent=5 // pred_fallthru
        _
      %p188 = scmp.lt.s32.totalorder %s15, 2
      // Predicated region
      $region29: #{tpu_custom_call.1} parent=5 // pred_check
        %p189 = pneg %p188
      $region30: #{tpu_custom_call.1} parent=5 // pred_check_branch
        %191 = sbr.rel (%p189) target = $region32
      $region31: #{tpu_custom_call.1} parent=5 // pred_region
        // Predicated region
        $region33: #{tpu_custom_call.1} parent=31 // pred_check
          %p192 = pneg %p35
        $region34: #{tpu_custom_call.1} parent=31 // pred_check_branch
          %194 = sbr.rel (%p192) target = $region36
        $region35: #{tpu_custom_call.1} parent=31 // pred_region
          %p195 = scmp.lt.s32.totalorder %s15, 1
          %s196 = scalar_select %p195, %s15, 1
          %s197 = smul.addr %s196, 4
          %s198 = scalar_lea.vmem %s0, %s197
        $region36: #{tpu_custom_call.1} parent=31 // pred_fallthru
          _
      $region32: #{tpu_custom_call.1} parent=5 // pred_fallthru
        _
      %p199 = scmp.le.s32.totalorder 1, %s15
      %p200 = scmp.lt.s32.totalorder %s15, 3
      %p201 = pnand %p199, %p200
      %p202 = pneg %p201
      // Predicated region
      $region37: #{tpu_custom_call.1} parent=5 // pred_check
        _
      $region38: #{tpu_custom_call.1} parent=5 // pred_check_branch
        %204 = sbr.rel (%p201) target = $region40
      $region39: #{tpu_custom_call.1} parent=5 // pred_region
        %s205 = ssub.s32 %s15, 1
        // Predicated region
        $region41: #{tpu_custom_call.1} parent=39 // pred_check
          %p206 = pneg %p104
        $region42: #{tpu_custom_call.1} parent=39 // pred_check_branch
          %208 = sbr.rel (%p206) target = $region44
        $region43: #{tpu_custom_call.1} parent=39 // pred_region
          %209 = dma.done [#allocation3], 7168
        $region44: #{tpu_custom_call.1} parent=39 // pred_fallthru
          _
        %p210 = scmp.lt.s32.totalorder %s20, 1
        %s211 = scalar_select %p210, %s20, 1
        %s212 = smul.addr %s211, 4
        %s213 = scalar_lea.vmem %s0, %s212
        %p214 = pneg %p41
        %p215 = pneg %p38
        %p216 = pneg %p62
        %p217 = pneg %p59
        %p218 = pneg %p83
        %p219 = pneg %p80
        %p220 = pneg %p104
        %p221 = pneg %p101
        %p222 = pneg %p125
        %p223 = pneg %p122
        %p224 = pneg %p151
        %p225 = pneg %p148
        %s226 = sand.u32 %s138, 1
        %s227 = scalar_lea.sflag [#allocation4], %s226
        %s228 = sand.u32 %s138, 1
        %s229 = smul.addr %s228, 16
        %s230 = scalar_lea.vmem [#allocation5], %s229
        %p231 = scmp.lt.s32.totalorder %s20, 1
        %s232 = scalar_select %p231, %s20, 1
        %s233 = smul.addr %s232, 4
        %s234 = scalar_lea.vmem %s0, %s233
        %v236 = vld [vmem:[%s234] sm:$0xf]
        %v237 = vld [vmem:[%s1] sm:$0xf]
        %v238 = vld [vmem:[%s1 + $0x4] sm:$0xf]
        %v239 = vld [vmem:[%s1 + $0x8] sm:$0xf]
        %v240 = vld [vmem:[%s1 + $0xc] sm:$0xf]
        %v241 = vld [vmem:[%s1 + $0x10] sm:$0xf]
        %v242 = vld [vmem:[%s1 + $0x14] sm:$0xf]
        %v243 = vld [vmem:[%s1 + $0x18] sm:$0xf]
        %v244 = vld [vmem:[%s1 + $0x1c] sm:$0xf]
        %v245 = vld [vmem:[%s1 + $0x20] sm:$0xf]
        %v246 = vld [vmem:[%s1 + $0x24] sm:$0xf]
        %v247 = vld [vmem:[%s1 + $0x28] sm:$0xf]
        %v248 = vld [vmem:[%s1 + $0x2c] sm:$0xf]
        %v249 = vld [vmem:[%s1 + $0x30] sm:$0xf]
        %v250 = vld [vmem:[%s1 + $0x34] sm:$0xf]
        %v251 = vld [vmem:[%s1 + $0x38] sm:$0xf]
        %v252 = vld [vmem:[%s1 + $0x3c] sm:$0xf]
        %v253 = vld [vmem:[%s2] sm:$0x1]
        %v255 = vlaneseq
        %v256 = vshrl.u32 %v255, 7
        %v257 = vsub.s32 0, %v256
        %v258 = vrot.slane %v253, %v257
        %v276 = vunpack.c.l.b16 %v237
        %v277 = vunpack.c.l.b16 %v238
        %v278 = vunpack.c.l.b16 %v239
        %v279 = vunpack.c.l.b16 %v240
        %v280 = vunpack.c.l.b16 %v241
        %v281 = vunpack.c.l.b16 %v242
        %v282 = vunpack.c.l.b16 %v243
        %v283 = vunpack.c.l.b16 %v244
        %v284 = vunpack.c.l.b16 %v245
        %v285 = vunpack.c.l.b16 %v246
        %v286 = vunpack.c.l.b16 %v247
        %v287 = vunpack.c.l.b16 %v248
        %v288 = vunpack.c.l.b16 %v249
        %v289 = vunpack.c.l.b16 %v250
        %v290 = vunpack.c.l.b16 %v251
        %v291 = vunpack.c.l.b16 %v252
        %v292 = vpack.c.b16 %v277, %v276
        %v293 = vpack.c.b16 %v279, %v278
        %v294 = vpack.c.b16 %v281, %v280
        %v295 = vpack.c.b16 %v283, %v282
        %v296 = vpack.c.b16 %v285, %v284
        %v297 = vpack.c.b16 %v287, %v286
        %v298 = vpack.c.b16 %v289, %v288
        %v299 = vpack.c.b16 %v291, %v290
        %308 = vmatprep.subr.bf16.mxu0 0
        %309 = vmatpush1.bf16.msra.mxu0 %v292
        %310 = vmatprep.subr.bf16.mxu0 0
        %311 = vmatpush1.bf16.msra.mxu0 %v293
        %312 = vmatprep.subr.bf16.mxu0 0
        %313 = vmatpush1.bf16.msra.mxu0 %v294
        %314 = vmatprep.subr.bf16.mxu0 0
        %315 = vmatpush1.bf16.msra.mxu0 %v295
        %316 = vmatprep.subr.bf16.mxu0 0
        %317 = vmatpush1.bf16.msra.mxu0 %v296
        %318 = vmatprep.subr.bf16.mxu0 0
        %319 = vmatpush1.bf16.msra.mxu0 %v297
        %320 = vmatprep.subr.bf16.mxu0 0
        %321 = vmatpush1.bf16.msra.mxu0 %v298
        %322 = vmatprep.subr.bf16.mxu0 0
        %323 = vmatpush1.bf16.msra.mxu0 %v299
        %324 = vmatprep.subr.bf16.mxu0 0
        %325 = vmatpush1.bf16.msra.mxu0 0
        %326 = vmatprep.subr.bf16.mxu0 0
        %327 = vmatpush1.bf16.msra.mxu0 0
        %328 = vmatprep.subr.bf16.mxu0 0
        %329 = vmatpush1.bf16.msra.mxu0 0
        %330 = vmatprep.subr.bf16.mxu0 0
        %331 = vmatpush1.bf16.msra.mxu0 0
        %332 = vmatprep.subr.bf16.mxu0 0
        %333 = vmatpush1.bf16.msra.mxu0 0
        %334 = vmatprep.subr.bf16.mxu0 0
        %335 = vmatpush1.bf16.msra.mxu0 0
        %336 = vmatprep.subr.bf16.mxu0 0
        %337 = vmatpush1.bf16.msra.mxu0 0
        %338 = vmatprep.subr.bf16.mxu0 0
        %339 = vmatpush1.bf16.msra.mxu0 0
        %340 = vmatprep.mubr.bf16.mxu0 0
        %341 = vmatmul.mubr.bf16.gmra.mrb[0].mxu0 %v236
        %v342 = vpop.f32.mrb[0].mxu0
        %v343 = vadd.f32 %v258, %v342
        %v344 = vpop.f32.mrb[0].mxu0
        %v345 = vpop.f32.mrb[0].mxu0
        %v346 = vpop.f32.mrb[0].mxu0
        %347 = vdwg.mxu0
        %v348 = vmax.f32 %v343, 0.0
        %v349 = vpack.c.bf16 %v348, %v348
        %v350 = vld [vmem:[#allocation2] sm:$0xff]
        %v351 = vld [vmem:[#allocation2 + $0x8] sm:$0xff]
        %v352 = vld [vmem:[#allocation2 + $0x10] sm:$0xff]
        %v353 = vld [vmem:[#allocation2 + $0x18] sm:$0xff]
        %v354 = vld [vmem:[#allocation2 + $0x20] sm:$0xff]
        %v355 = vld [vmem:[#allocation2 + $0x28] sm:$0xff]
        %v356 = vld [vmem:[#allocation2 + $0x30] sm:$0xff]
        %v357 = vld [vmem:[#allocation2 + $0x38] sm:$0xff]
        %v358 = vld [vmem:[#allocation2 + $0x40] sm:$0xff]
        %v359 = vld [vmem:[#allocation2 + $0x48] sm:$0xff]
        %v360 = vld [vmem:[#allocation2 + $0x50] sm:$0xff]
        %v361 = vld [vmem:[#allocation2 + $0x58] sm:$0xff]
        %v362 = vld [vmem:[#allocation2 + $0x60] sm:$0xff]
        %v363 = vld [vmem:[#allocation2 + $0x68] sm:$0xff]
        %v364 = vld [vmem:[#allocation2 + $0x70] sm:$0xff]
        %v365 = vld [vmem:[#allocation2 + $0x78] sm:$0xff]
        %v366 = vld [vmem:[#allocation2 + $0x80] sm:$0xff]
        %v367 = vld [vmem:[#allocation2 + $0x88] sm:$0xff]
        %v368 = vld [vmem:[#allocation2 + $0x90] sm:$0xff]
        %v369 = vld [vmem:[#allocation2 + $0x98] sm:$0xff]
        %v370 = vld [vmem:[#allocation2 + $0xa0] sm:$0xff]
        %v371 = vld [vmem:[#allocation2 + $0xa8] sm:$0xff]
        %v372 = vld [vmem:[#allocation2 + $0xb0] sm:$0xff]
        %v373 = vld [vmem:[#allocation2 + $0xb8] sm:$0xff]
        %v374 = vld [vmem:[#allocation2 + $0xc0] sm:$0xff]
        %v375 = vld [vmem:[#allocation2 + $0xc8] sm:$0xff]
        %v376 = vld [vmem:[#allocation2 + $0xd0] sm:$0xff]
        %v377 = vld [vmem:[#allocation2 + $0xd8] sm:$0xff]
        %v378 = vld [vmem:[#allocation2 + $0xe0] sm:$0xff]
        %v379 = vld [vmem:[#allocation2 + $0xe8] sm:$0xff]
        %v380 = vld [vmem:[#allocation2 + $0xf0] sm:$0xff]
        %v381 = vld [vmem:[#allocation2 + $0xf8] sm:$0xff]
        %v382 = vld [vmem:[#allocation2 + $0x100] sm:$0xff]
        %v383 = vld [vmem:[#allocation2 + $0x108] sm:$0xff]
        %v384 = vld [vmem:[#allocation2 + $0x110] sm:$0xff]
        %v385 = vld [vmem:[#allocation2 + $0x118] sm:$0xff]
        %v386 = vld [vmem:[#allocation2 + $0x120] sm:$0xff]
        %v387 = vld [vmem:[#allocation2 + $0x128] sm:$0xff]
        %v388 = vld [vmem:[#allocation2 + $0x130] sm:$0xff]
        %v389 = vld [vmem:[#allocation2 + $0x138] sm:$0xff]
        %v390 = vld [vmem:[#allocation2 + $0x140] sm:$0xff]
        %v391 = vld [vmem:[#allocation2 + $0x148] sm:$0xff]
        %v392 = vld [vmem:[#allocation2 + $0x150] sm:$0xff]
        %v393 = vld [vmem:[#allocation2 + $0x158] sm:$0xff]
        %v394 = vld [vmem:[#allocation2 + $0x160] sm:$0xff]
        %v395 = vld [vmem:[#allocation2 + $0x168] sm:$0xff]
        %v396 = vld [vmem:[#allocation2 + $0x170] sm:$0xff]
        %v397 = vld [vmem:[#allocation2 + $0x178] sm:$0xff]
        %v398 = vld [vmem:[#allocation2 + $0x180] sm:$0xff]
        %v399 = vld [vmem:[#allocation2 + $0x188] sm:$0xff]
        %v400 = vld [vmem:[#allocation2 + $0x190] sm:$0xff]
        %v401 = vld [vmem:[#allocation2 + $0x198] sm:$0xff]
        %v402 = vld [vmem:[#allocation2 + $0x1a0] sm:$0xff]
        %v403 = vld [vmem:[#allocation2 + $0x1a8] sm:$0xff]
        %v404 = vld [vmem:[#allocation2 + $0x1b0] sm:$0xff]
        %v405 = vld [vmem:[#allocation2 + $0x1b8] sm:$0xff]
        %v406 = vld [vmem:[%s4] sm:$0xf]
        %v408 = vlaneseq
        %v409 = vshrl.u32 %v408, 7
        %v410 = vsub.s32 0, %v409
        %v411 = vrot.slane %v406, %v410
        %v412 = vlaneseq
        %v413 = vshrl.u32 %v412, 7
        %v414 = vsub.s32 1, %v413
        %v415 = vrot.slane %v406, %v414
        %v416 = vlaneseq
        %v417 = vshrl.u32 %v416, 7
        %v418 = vsub.s32 2, %v417
        %v419 = vrot.slane %v406, %v418
        %v420 = vlaneseq
        %v421 = vshrl.u32 %v420, 7
        %v422 = vsub.s32 3, %v421
        %v423 = vrot.slane %v406, %v422
        %v484 = vunpack.c.l.b16 %v350
        %v485 = vunpack.c.h.b16 %v350
        %v486 = vunpack.c.l.b16 %v351
        %v487 = vunpack.c.h.b16 %v351
        %v488 = vunpack.c.l.b16 %v352
        %v489 = vunpack.c.h.b16 %v352
        %v490 = vunpack.c.l.b16 %v353
        %v491 = vunpack.c.h.b16 %v353
        %v492 = vunpack.c.l.b16 %v354
        %v493 = vunpack.c.h.b16 %v354
        %v494 = vunpack.c.l.b16 %v355
        %v495 = vunpack.c.h.b16 %v355
        %v496 = vunpack.c.l.b16 %v356
        %v497 = vunpack.c.h.b16 %v356
        %v498 = vunpack.c.l.b16 %v357
        %v499 = vunpack.c.h.b16 %v357
        %v500 = vunpack.c.l.b16 %v358
        %v501 = vunpack.c.h.b16 %v358
        %v502 = vunpack.c.l.b16 %v359
        %v503 = vunpack.c.h.b16 %v359
        %v504 = vunpack.c.l.b16 %v360
        %v505 = vunpack.c.h.b16 %v360
        %v506 = vunpack.c.l.b16 %v361
        %v507 = vunpack.c.h.b16 %v361
        %v508 = vunpack.c.l.b16 %v362
        %v509 = vunpack.c.h.b16 %v362
        %v510 = vunpack.c.l.b16 %v363
        %v511 = vunpack.c.h.b16 %v363
        %v512 = vunpack.c.l.b16 %v364
        %v513 = vunpack.c.h.b16 %v364
        %v514 = vunpack.c.l.b16 %v365
        %v515 = vunpack.c.h.b16 %v365
        %v516 = vunpack.c.l.b16 %v366
        %v517 = vunpack.c.h.b16 %v366
        %v518 = vunpack.c.l.b16 %v367
        %v519 = vunpack.c.h.b16 %v367
        %v520 = vunpack.c.l.b16 %v368
        %v521 = vunpack.c.h.b16 %v368
        %v522 = vunpack.c.l.b16 %v369
        %v523 = vunpack.c.h.b16 %v369
        %v524 = vunpack.c.l.b16 %v370
        %v525 = vunpack.c.h.b16 %v370
        %v526 = vunpack.c.l.b16 %v371
        %v527 = vunpack.c.h.b16 %v371
        %v528 = vunpack.c.l.b16 %v372
        %v529 = vunpack.c.h.b16 %v372
        %v530 = vunpack.c.l.b16 %v373
        %v531 = vunpack.c.h.b16 %v373
        %v532 = vunpack.c.l.b16 %v374
        %v533 = vunpack.c.h.b16 %v374
        %v534 = vunpack.c.l.b16 %v375
        %v535 = vunpack.c.h.b16 %v375
        %v536 = vunpack.c.l.b16 %v376
        %v537 = vunpack.c.h.b16 %v376
        %v538 = vunpack.c.l.b16 %v377
        %v539 = vunpack.c.h.b16 %v377
        %v540 = vunpack.c.l.b16 %v378
        %v541 = vunpack.c.h.b16 %v378
        %v542 = vunpack.c.l.b16 %v379
        %v543 = vunpack.c.h.b16 %v379
        %v544 = vunpack.c.l.b16 %v380
        %v545 = vunpack.c.h.b16 %v380
        %v546 = vunpack.c.l.b16 %v381
        %v547 = vunpack.c.h.b16 %v381
        %v548 = vunpack.c.l.b16 %v382
        %v549 = vunpack.c.h.b16 %v382
        %v550 = vunpack.c.l.b16 %v383
        %v551 = vunpack.c.h.b16 %v383
        %v552 = vunpack.c.l.b16 %v384
        %v553 = vunpack.c.h.b16 %v384
        %v554 = vunpack.c.l.b16 %v385
        %v555 = vunpack.c.h.b16 %v385
        %v556 = vunpack.c.l.b16 %v386
        %v557 = vunpack.c.h.b16 %v386
        %v558 = vunpack.c.l.b16 %v387
        %v559 = vunpack.c.h.b16 %v387
        %v560 = vunpack.c.l.b16 %v388
        %v561 = vunpack.c.h.b16 %v388
        %v562 = vunpack.c.l.b16 %v389
        %v563 = vunpack.c.h.b16 %v389
        %v564 = vunpack.c.l.b16 %v390
        %v565 = vunpack.c.h.b16 %v390
        %v566 = vunpack.c.l.b16 %v391
        %v567 = vunpack.c.h.b16 %v391
        %v568 = vunpack.c.l.b16 %v392
        %v569 = vunpack.c.h.b16 %v392
        %v570 = vunpack.c.l.b16 %v393
        %v571 = vunpack.c.h.b16 %v393
        %v572 = vunpack.c.l.b16 %v394
        %v573 = vunpack.c.h.b16 %v394
        %v574 = vunpack.c.l.b16 %v395
        %v575 = vunpack.c.h.b16 %v395
        %v576 = vunpack.c.l.b16 %v396
        %v577 = vunpack.c.h.b16 %v396
        %v578 = vunpack.c.l.b16 %v397
        %v579 = vunpack.c.h.b16 %v397
        %v580 = vunpack.c.l.b16 %v398
        %v581 = vunpack.c.h.b16 %v398
        %v582 = vunpack.c.l.b16 %v399
        %v583 = vunpack.c.h.b16 %v399
        %v584 = vunpack.c.l.b16 %v400
        %v585 = vunpack.c.h.b16 %v400
        %v586 = vunpack.c.l.b16 %v401
        %v587 = vunpack.c.h.b16 %v401
        %v588 = vunpack.c.l.b16 %v402
        %v589 = vunpack.c.h.b16 %v402
        %v590 = vunpack.c.l.b16 %v403
        %v591 = vunpack.c.h.b16 %v403
        %v592 = vunpack.c.l.b16 %v404
        %v593 = vunpack.c.h.b16 %v404
        %v594 = vunpack.c.l.b16 %v405
        %v595 = vunpack.c.h.b16 %v405
        %v596 = vpack.c.b16 %v488, %v484
        %v597 = vpack.c.b16 %v489, %v485
        %v598 = vpack.c.b16 %v490, %v486
        %v599 = vpack.c.b16 %v491, %v487
        %v600 = vpack.c.b16 %v496, %v492
        %v601 = vpack.c.b16 %v497, %v493
        %v602 = vpack.c.b16 %v498, %v494
        %v603 = vpack.c.b16 %v499, %v495
        %v604 = vpack.c.b16 %v504, %v500
        %v605 = vpack.c.b16 %v505, %v501
        %v606 = vpack.c.b16 %v506, %v502
        %v607 = vpack.c.b16 %v507, %v503
        %v608 = vpack.c.b16 %v512, %v508
        %v609 = vpack.c.b16 %v513, %v509
        %v610 = vpack.c.b16 %v514, %v510
        %v611 = vpack.c.b16 %v515, %v511
        %v612 = vpack.c.b16 %v520, %v516
        %v613 = vpack.c.b16 %v521, %v517
        %v614 = vpack.c.b16 %v522, %v518
        %v615 = vpack.c.b16 %v523, %v519
        %v616 = vpack.c.b16 %v528, %v524
        %v617 = vpack.c.b16 %v529, %v525
        %v618 = vpack.c.b16 %v530, %v526
        %v619 = vpack.c.b16 %v531, %v527
        %v620 = vpack.c.b16 %v536, %v532
        %v621 = vpack.c.b16 %v537, %v533
        %v622 = vpack.c.b16 %v538, %v534
        %v623 = vpack.c.b16 %v539, %v535
        %v624 = vpack.c.b16 %v544, %v540
        %v625 = vpack.c.b16 %v545, %v541
        %v626 = vpack.c.b16 %v546, %v542
        %v627 = vpack.c.b16 %v547, %v543
        %v628 = vpack.c.b16 %v552, %v548
        %v629 = vpack.c.b16 %v553, %v549
        %v630 = vpack.c.b16 %v554, %v550
        %v631 = vpack.c.b16 %v555, %v551
        %v632 = vpack.c.b16 %v560, %v556
        %v633 = vpack.c.b16 %v561, %v557
        %v634 = vpack.c.b16 %v562, %v558
        %v635 = vpack.c.b16 %v563, %v559
        %v636 = vpack.c.b16 %v568, %v564
        %v637 = vpack.c.b16 %v569, %v565
        %v638 = vpack.c.b16 %v570, %v566
        %v639 = vpack.c.b16 %v571, %v567
        %v640 = vpack.c.b16 %v576, %v572
        %v641 = vpack.c.b16 %v577, %v573
        %v642 = vpack.c.b16 %v578, %v574
        %v643 = vpack.c.b16 %v579, %v575
        %v644 = vpack.c.b16 %v584, %v580
        %v645 = vpack.c.b16 %v585, %v581
        %v646 = vpack.c.b16 %v586, %v582
        %v647 = vpack.c.b16 %v587, %v583
        %v648 = vpack.c.b16 %v592, %v588
        %v649 = vpack.c.b16 %v593, %v589
        %v650 = vpack.c.b16 %v594, %v590
        %v651 = vpack.c.b16 %v595, %v591
        %vm708 = vcmask 785408
        %v710 = vsel %vm708, %v349, 0
        %712 = vmatprep.subr.bf16.mxu0 %v597
        %713 = vmatpush1.bf16.msra.mxu0 %v596
        %714 = vmatprep.subr.bf16.mxu0 %v601
        %715 = vmatpush1.bf16.msra.mxu0 %v600
        %716 = vmatprep.subr.bf16.mxu0 %v605
        %717 = vmatpush1.bf16.msra.mxu0 %v604
        %718 = vmatprep.subr.bf16.mxu0 %v609
        %719 = vmatpush1.bf16.msra.mxu0 %v608
        %720 = vmatprep.subr.bf16.mxu0 %v613
        %721 = vmatpush1.bf16.msra.mxu0 %v612
        %722 = vmatprep.subr.bf16.mxu0 %v617
        %723 = vmatpush1.bf16.msra.mxu0 %v616
        %724 = vmatprep.subr.bf16.mxu0 %v621
        %725 = vmatpush1.bf16.msra.mxu0 %v620
        %726 = vmatprep.subr.bf16.mxu0 %v625
        %727 = vmatpush1.bf16.msra.mxu0 %v624
        %728 = vmatprep.subr.bf16.mxu0 %v629
        %729 = vmatpush1.bf16.msra.mxu0 %v628
        %730 = vmatprep.subr.bf16.mxu0 %v633
        %731 = vmatpush1.bf16.msra.mxu0 %v632
        %732 = vmatprep.subr.bf16.mxu0 %v637
        %733 = vmatpush1.bf16.msra.mxu0 %v636
        %734 = vmatprep.subr.bf16.mxu0 %v641
        %735 = vmatpush1.bf16.msra.mxu0 %v640
        %736 = vmatprep.subr.bf16.mxu0 %v645
        %737 = vmatpush1.bf16.msra.mxu0 %v644
        %738 = vmatprep.subr.bf16.mxu0 %v649
        %739 = vmatpush1.bf16.msra.mxu0 %v648
        %740 = vmatprep.subr.bf16.mxu0 0
        %741 = vmatpush1.bf16.msra.mxu0 0
        %742 = vmatprep.subr.bf16.mxu0 0
        %743 = vmatpush1.bf16.msra.mxu0 0
        %744 = vmatprep.mubr.bf16.mxu0 %v710
        %745 = vmatmul.mubr.bf16.gmra.mrb[0].mxu0 %v236
        %v746 = vpop.f32.mrb[0].mxu0
        %v747 = vadd.f32 %v411, %v746
        %v748 = vpop.f32.mrb[0].mxu0
        %v749 = vadd.f32 %v415, %v748
        %v750 = vpop.f32.mrb[0].mxu0
        %v751 = vpop.f32.mrb[0].mxu0
        %752 = vdwg.mxu0
        %753 = vmatprep.subr.bf16.mxu0 %v599
        %754 = vmatpush1.bf16.msra.mxu0 %v598
        %755 = vmatprep.subr.bf16.mxu0 %v603
        %756 = vmatpush1.bf16.msra.mxu0 %v602
        %757 = vmatprep.subr.bf16.mxu0 %v607
        %758 = vmatpush1.bf16.msra.mxu0 %v606
        %759 = vmatprep.subr.bf16.mxu0 %v611
        %760 = vmatpush1.bf16.msra.mxu0 %v610
        %761 = vmatprep.subr.bf16.mxu0 %v615
        %762 = vmatpush1.bf16.msra.mxu0 %v614
        %763 = vmatprep.subr.bf16.mxu0 %v619
        %764 = vmatpush1.bf16.msra.mxu0 %v618
        %765 = vmatprep.subr.bf16.mxu0 %v623
        %766 = vmatpush1.bf16.msra.mxu0 %v622
        %767 = vmatprep.subr.bf16.mxu0 %v627
        %768 = vmatpush1.bf16.msra.mxu0 %v626
        %769 = vmatprep.subr.bf16.mxu0 %v631
        %770 = vmatpush1.bf16.msra.mxu0 %v630
        %771 = vmatprep.subr.bf16.mxu0 %v635
        %772 = vmatpush1.bf16.msra.mxu0 %v634
        %773 = vmatprep.subr.bf16.mxu0 %v639
        %774 = vmatpush1.bf16.msra.mxu0 %v638
        %775 = vmatprep.subr.bf16.mxu0 %v643
        %776 = vmatpush1.bf16.msra.mxu0 %v642
        %777 = vmatprep.subr.bf16.mxu0 %v647
        %778 = vmatpush1.bf16.msra.mxu0 %v646
        %779 = vmatprep.subr.bf16.mxu0 %v651
        %780 = vmatpush1.bf16.msra.mxu0 %v650
        %781 = vmatprep.subr.bf16.mxu0 0
        %782 = vmatpush1.bf16.msra.mxu0 0
        %783 = vmatprep.subr.bf16.mxu0 0
        %784 = vmatpush1.bf16.msra.mxu0 0
        %785 = vmatprep.mubr.bf16.mxu0 %v710
        %786 = vmatmul.mubr.bf16.gmra.mrb[0].mxu0 %v236
        %v787 = vpop.f32.mrb[0].mxu0
        %v788 = vadd.f32 %v419, %v787
        %v789 = vpop.f32.mrb[0].mxu0
        %v790 = vadd.f32 %v423, %v789
        %v791 = vpop.f32.mrb[0].mxu0
        %v792 = vpop.f32.mrb[0].mxu0
        %793 = vdwg.mxu0
        %v794 = vpack.c.bf16 %v747, %v747
        %v795 = vpack.c.bf16 %v749, %v749
        %v796 = vpack.c.bf16 %v788, %v788
        %v797 = vpack.c.bf16 %v790, %v790
        %v802 = vunpack.c.l.b16 %v794
        %v803 = vunpack.c.l.b16 %v795
        %v804 = vunpack.c.l.b16 %v796
        %v805 = vunpack.c.l.b16 %v797
        %v806 = vpack.c.b16 %v803, %v802
        %v807 = vpack.c.b16 %v805, %v804
        %810 = vst [vmem:[%s230] sm:$0xff] %v806
        %811 = vst [vmem:[%s230 + $0x8] sm:$0xff] %v807
        %s812 = sand.u32 %s138, 1
        %s813 = scalar_lea.sflag [#allocation4], %s812
        %s814 = sand.u32 %s138, 1
        %s815 = smul.addr %s814, 16
        %s816 = scalar_lea.vmem [#allocation5], %s815
        // Predicated region
        $region45: #{tpu_custom_call.1} parent=39 // pred_check
          %p817 = pneg %p148
        $region46: #{tpu_custom_call.1} parent=39 // pred_check_branch
          %819 = sbr.rel (%p817) target = $region48
        $region47: #{tpu_custom_call.1} parent=39 // pred_region
          %s821 = ssub.s32 256, 256
          %822 = vsyncadd %s813, %s821
          %s823 = smul.addr %s20, 4
          %s824 = smul.addr %s823, 64
          %s825 = scalar_lea.hbm %s5, %s824
          %s827 = sshll.u32 %s816, 4
          %s828 = int_to_ptr.vmem [resolvable:$true] %s827
          %830 = dma.vmem_to_hbm [thread:$0]  %s828, 256, %s825, %s813
        $region48: #{tpu_custom_call.1} parent=39 // pred_fallthru
          _
      $region40: #{tpu_custom_call.1} parent=5 // pred_fallthru
        _
      %p831 = scmp.le.s32.totalorder 2, %s15
      // Predicated region
      $region49: #{tpu_custom_call.1} parent=5 // pred_check
        %p832 = pneg %p831
      $region50: #{tpu_custom_call.1} parent=5 // pred_check_branch
        %834 = sbr.rel (%p832) target = $region52
      $region51: #{tpu_custom_call.1} parent=5 // pred_region
        %s835 = ssub.s32 %s15, 2
        // Predicated region
        $region53: #{tpu_custom_call.1} parent=51 // pred_check
          %p836 = pneg %p154
        $region54: #{tpu_custom_call.1} parent=51 // pred_check_branch
          %838 = sbr.rel (%p836) target = $region56
        $region55: #{tpu_custom_call.1} parent=51 // pred_region
          %s839 = sand.u32 %s139, 1
          %s840 = scalar_lea.sflag [#allocation4], %s839
          %s841 = sand.u32 %s139, 1
          %s842 = smul.addr %s841, 16
          %s843 = scalar_lea.vmem [#allocation5], %s842
          %844 = dma.done %s840, 256
        $region56: #{tpu_custom_call.1} parent=51 // pred_fallthru
          _
      $region52: #{tpu_custom_call.1} parent=5 // pred_fallthru
        _
    $region6: #{tpu_custom_call.1} parent=1 // loop_footer
      %s19 = sadd.s32 1, %s15
    $region7: #{tpu_custom_call.1} parent=1 // loop_footer_branch
      %14 = sbr.rel target = $region3
    $region8: #{tpu_custom_call.1} parent=1 // loop_exit
      _
    %845 = vsyncpa [#allocation3], 1
    %s846 = scalar_lea.sflag [#allocation3], 1
    %847 = vsyncpa %s846, 1
    %848 = vsyncpa [#allocation4], 1
    %s849 = scalar_lea.sflag [#allocation4], 1
    %850 = vsyncpa %s849, 1

</llo_original>
